<compile_context>
chip_gen: v7x
topology: tpu7x:2x2x1
jax: 0.10.0
libtpu: 0.0.40
codegen_flags: <defaults>
</compile_context>

<pallas_src>
import functools

import jax
import jax.numpy as jnp
from jax.experimental import pallas as pl
from jax.experimental.pallas import tpu as pltpu


# -----------------------------------------------------------------------------
# helpers (shared by kernels and the pure-JAX reference)
# -----------------------------------------------------------------------------

def _round_up(x, m):
    return ((x + m - 1) // m) * m


def _pick_tile(n, max_tile=512):
    """Largest divisor of n that is a multiple of 8 and <= max_tile, else n (full).

    (512 suits v5e/v6e; 256 would be preferred on v7x -- both map to legal
    (8,128)-granule blocks; full blocks are used at toy shapes.)"""
    if n <= max_tile:
        return n
    for t in range(max_tile, 7, -1):
        if n % t == 0 and t % 8 == 0:
            return t
    return n


def _gelu_tanh(x):
    # HF "gelu_pytorch_tanh"
    return 0.5 * x * (1.0 + jnp.tanh(0.7978845608028654 * (x + 0.044715 * x * x * x)))


def _softmax_last(x):
    x = x - jnp.max(x, axis=-1, keepdims=True)
    e = jnp.exp(x)
    return e / jnp.sum(e, axis=-1, keepdims=True)


def _split_heads(x, B, N, H, Dh):
    # (B*N, E) -> (B*H, N, Dh)
    return x.reshape(B, N, H, Dh).transpose(0, 2, 1, 3).reshape(B * H, N, Dh)


def _merge_heads(o, B, N, H, Dh):
    # (B*H, N, Dh) -> (B*N, E)
    return o.reshape(B, H, N, Dh).transpose(0, 2, 1, 3).reshape(B * N, H * Dh)


# -----------------------------------------------------------------------------
# Kernel 1: SigLipVisionEmbeddings (patch conv as im2col matmul + pos embedding)
# -----------------------------------------------------------------------------

def _embed_kernel(patch_ref, w_ref, posb_ref, out_ref):
    # patch_ref: (1, TN, Kp) bf16   -- streamed per (batch, patch-tile)
    # w_ref:     (Kp, E)    bf16   -- VMEM-resident flattened conv weight
    # posb_ref:  (TN, E)    f32    -- position embedding with conv bias folded in
    # out_ref:   (1, TN, E)
    acc = jnp.dot(patch_ref[0], w_ref[...], preferred_element_type=jnp.float32)
    out_ref[0] = (acc + posb_ref[...]).astype(out_ref.dtype)


def siglip_vision_embeddings(pixel_values, conv_weight, conv_bias, pos_embedding,
                             *, patch_size, k_multiple=256, out_dtype=jnp.float32):
    """pixel_values: (B, C, H, W) NCHW; conv_weight: (E, C, P, P); conv_bias: (E,);
    pos_embedding: (N, E).  Returns (B, N, E)."""
    B, C, H, W = pixel_values.shape
    E = conv_weight.shape[0]
    P = patch_size
    GH, GW = H // P, W // P
    N = GH * GW
    K = C * P * P
    Kp = _round_up(K, k_multiple)   # pad contraction dim -> no ragged MXU tail

    # im2col: (B,C,GH,P,GW,P) -> (B,GH,GW,C,P,P) -> (B,N,K); patches are row-major
    # over the (GH,GW) grid, features in (c,kh,kw) order == Conv2d weight layout.
    patches = pixel_values.reshape(B, C, GH, P, GW, P)
    patches = patches.transpose(0, 2, 4, 1, 3, 5).reshape(B, N, K)
    if Kp != K:
        patches = jnp.pad(patches, ((0, 0), (0, 0), (0, Kp - K)))
    patches = patches.astype(jnp.bfloat16)                      # bf16 MXU operand

    w_flat = conv_weight.reshape(E, K).T                         # (K, E)
    if Kp != K:
        w_flat = jnp.pad(w_flat, ((0, Kp - K), (0, 0)))
    w_flat = w_flat.astype(jnp.bfloat16)                         # bf16 MXU operand

    # Fold conv bias into the position table (constant -> free hoist).
    posb = (pos_embedding + conv_bias[None, :]).astype(jnp.float32)   # (N, E)

    TN = _pick_tile(N)
    num_n = N // TN

    # VMEM budget: double-buffered streams + resident weight (v7x has only 64 MiB).
    est = (2 * TN * Kp * 2        # patches, bf16, double-buffered
           + Kp * E * 2           # weight, bf16, resident
           + 2 * TN * E * 4       # pos+bias, f32, double-buffered
           + 2 * TN * E * 4)      # output, f32, double-buffered
    vmem_limit = int(min(max(4 * est, 32 * 1024 * 1024), 48 * 1024 * 1024))

    grid_spec = pltpu.PrefetchScalarGridSpec(
        num_scalar_prefetch=0,
        grid=(B, num_n),
        in_specs=[
            pl.BlockSpec((1, TN, Kp), lambda b, n: (b, n, 0)),   # streamed patches
            pl.BlockSpec((Kp, E), lambda b, n: (0, 0)),          # resident weight
            pl.BlockSpec((TN, E), lambda b, n: (n, 0)),          # pos + bias tile
        ],
        out_specs=pl.BlockSpec((1, TN, E), lambda b, n: (b, n, 0)),
    )
    return pl.pallas_call(
        _embed_kernel,
        out_shape=jax.ShapeDtypeStruct((B, N, E), out_dtype),
        grid_spec=grid_spec,
        compiler_params=pltpu.CompilerParams(
            dimension_semantics=("parallel", "parallel"),
            vmem_limit_bytes=vmem_limit),
    )(patches, w_flat, posb)


# -----------------------------------------------------------------------------
# Kernel 2: linear (matmul + bias, optional gelu_pytorch_tanh)
# -----------------------------------------------------------------------------

def _linear_kernel(x_ref, w_ref, b_ref, out_ref, *, activation):
    acc = jnp.dot(x_ref[...], w_ref[...], preferred_element_type=jnp.float32)
    acc = acc + b_ref[...]
    if activation == "gelu_tanh":
        acc = _gelu_tanh(acc)
    out_ref[...] = acc.astype(out_ref.dtype)


def pallas_linear(x, w, b, *, activation=None, out_dtype=jnp.float32):
    """x: (R, Din) -> (R, Dout).  bf16 MXU operands, f32 accumulate."""
    R, Din = x.shape
    Dout = w.shape[1]
    TR = _pick_tile(R)
    return pl.pallas_call(
        functools.partial(_linear_kernel, activation=activation),
        out_shape=jax.ShapeDtypeStruct((R, Dout), out_dtype),
        grid_spec=pltpu.PrefetchScalarGridSpec(
            num_scalar_prefetch=0,
            grid=(R // TR,),
            in_specs=[
                pl.BlockSpec((TR, Din), lambda r: (r, 0)),
                pl.BlockSpec((Din, Dout), lambda r: (0, 0)),     # resident weight
                pl.BlockSpec((1, Dout), lambda r: (0, 0)),
            ],
            out_specs=pl.BlockSpec((TR, Dout), lambda r: (r, 0)),
        ),
        compiler_params=pltpu.CompilerParams(dimension_semantics=("parallel",)),
    )(x.astype(jnp.bfloat16), w.astype(jnp.bfloat16),
      b.reshape(1, Dout).astype(jnp.float32))


# -----------------------------------------------------------------------------
# Kernel 3: layernorm (f32 statistics)
# -----------------------------------------------------------------------------

def _layernorm_kernel(x_ref, g_ref, b_ref, out_ref, *, eps):
    x = x_ref[...].astype(jnp.float32)
    mu = jnp.mean(x, axis=-1, keepdims=True)
    xc = x - mu
    var = jnp.mean(xc * xc, axis=-1, keepdims=True)
    y = xc * jax.lax.rsqrt(var + eps)
    out_ref[...] = (y * g_ref[...] + b_ref[...]).astype(out_ref.dtype)


def pallas_layernorm(x, gamma, beta, *, eps, out_dtype=jnp.float32):
    R, E = x.shape
    TR = _pick_tile(R)
    return pl.pallas_call(
        functools.partial(_layernorm_kernel, eps=eps),
        out_shape=jax.ShapeDtypeStruct((R, E), out_dtype),
        grid_spec=pltpu.PrefetchScalarGridSpec(
            num_scalar_prefetch=0,
            grid=(R // TR,),
            in_specs=[
                pl.BlockSpec((TR, E), lambda r: (r, 0)),
                pl.BlockSpec((1, E), lambda r: (0, 0)),
                pl.BlockSpec((1, E), lambda r: (0, 0)),
            ],
            out_specs=pl.BlockSpec((TR, E), lambda r: (r, 0)),
        ),
        compiler_params=pltpu.CompilerParams(dimension_semantics=("parallel",)),
    )(x.astype(jnp.float32), gamma.reshape(1, E).astype(jnp.float32),
      beta.reshape(1, E).astype(jnp.float32))


# -----------------------------------------------------------------------------
# Kernel 4: per-head softmax attention  softmax(q k^T * scale) v
# -----------------------------------------------------------------------------

def _attn_kernel(q_ref, k_ref, v_ref, out_ref, *, scale):
    q = q_ref[0]                               # (Nq, Dh) bf16
    k = k_ref[0]                               # (Nk, Dh) bf16
    v = v_ref[0]                               # (Nk, Dh) bf16
    s = jax.lax.dot_general(q, k, (((1,), (1,)), ((), ())),
                            preferred_element_type=jnp.float32) * scale
    p = _softmax_last(s)                       # f32 softmax
    o = jnp.dot(p.astype(jnp.bfloat16), v, preferred_element_type=jnp.float32)
    out_ref[0] = o.astype(out_ref.dtype)


def pallas_mha(q, k, v, *, scale, out_dtype=jnp.float32):
    """q: (BH, Nq, Dh); k, v: (BH, Nk, Dh) -> (BH, Nq, Dh)."""
    BH, Nq, Dh = q.shape
    Nk = k.shape[1]
    return pl.pallas_call(
        functools.partial(_attn_kernel, scale=scale),
        out_shape=jax.ShapeDtypeStruct((BH, Nq, Dh), out_dtype),
        grid_spec=pltpu.PrefetchScalarGridSpec(
            num_scalar_prefetch=0,
            grid=(BH,),
            in_specs=[
                pl.BlockSpec((1, Nq, Dh), lambda i: (i, 0, 0)),
                pl.BlockSpec((1, Nk, Dh), lambda i: (i, 0, 0)),
                pl.BlockSpec((1, Nk, Dh), lambda i: (i, 0, 0)),
            ],
            out_specs=pl.BlockSpec((1, Nq, Dh), lambda i: (i, 0, 0)),
        ),
        compiler_params=pltpu.CompilerParams(dimension_semantics=("parallel",)),
    )(q.astype(jnp.bfloat16), k.astype(jnp.bfloat16), v.astype(jnp.bfloat16))


# -----------------------------------------------------------------------------
# Model composition (encoder layer, pooling head, full transformer)
# -----------------------------------------------------------------------------

def siglip_encoder_layer(x, p, *, num_heads, eps):
    B, N, E = x.shape
    Dh = E // num_heads
    scale = Dh ** -0.5
    x2 = x.reshape(B * N, E)

    h = pallas_layernorm(x2, p["ln1_g"], p["ln1_b"], eps=eps)
    q = pallas_linear(h, p["q_w"], p["q_b"])
    k = pallas_linear(h, p["k_w"], p["k_b"])
    v = pallas_linear(h, p["v_w"], p["v_b"])
    o = pallas_mha(_split_heads(q, B, N, num_heads, Dh),
                   _split_heads(k, B, N, num_heads, Dh),
                   _split_heads(v, B, N, num_heads, Dh), scale=scale)
    attn_out = pallas_linear(_merge_heads(o, B, N, num_heads, Dh), p["o_w"], p["o_b"])
    x2 = x2 + attn_out

    h = pallas_layernorm(x2, p["ln2_g"], p["ln2_b"], eps=eps)
    h = pallas_linear(h, p["fc1_w"], p["fc1_b"], activation="gelu_tanh")
    h = pallas_linear(h, p["fc2_w"], p["fc2_b"])
    x2 = x2 + h
    return x2.reshape(B, N, E)


def siglip_pooling_head(x, p, *, num_heads, eps):
    """SigLipMultiheadAttentionPoolingHead: probe-query attention + MLP.  (B,N,E)->(B,E)."""
    B, N, E = x.shape
    Dh = E // num_heads
    scale = Dh ** -0.5

    probe = jnp.broadcast_to(p["probe"].reshape(1, E), (B, E))
    q = pallas_linear(probe, p["in_q_w"], p["in_q_b"])            # (B, E)
    k = pallas_linear(x.reshape(B * N, E), p["in_k_w"], p["in_k_b"])
    v = pallas_linear(x.reshape(B * N, E), p["in_v_w"], p["in_v_b"])

    qh = q.reshape(B, 1, num_heads, Dh).transpose(0, 2, 1, 3).reshape(B * num_heads, 1, Dh)
    o = pallas_mha(qh, _split_heads(k, B, N, num_heads, Dh),
                   _split_heads(v, B, N, num_heads, Dh), scale=scale)   # (B*H, 1, Dh)
    attn = pallas_linear(o.reshape(B, num_heads * Dh), p["out_w"], p["out_b"])  # (B, E)

    h = pallas_layernorm(attn, p["ln_g"], p["ln_b"], eps=eps)
    h = pallas_linear(h, p["fc1_w"], p["fc1_b"], activation="gelu_tanh")
    h = pallas_linear(h, p["fc2_w"], p["fc2_b"])
    return attn + h                                               # == hidden_state[:, 0]


def siglip_vision_transformer(pixel_values, params, *, patch_size, num_heads, eps):
    x = siglip_vision_embeddings(pixel_values, params["patch_w"], params["patch_b"],
                                 params["pos_emb"], patch_size=patch_size)
    for layer_p in params["layers"]:
        x = siglip_encoder_layer(x, layer_p, num_heads=num_heads, eps=eps)
    B, N, E = x.shape
    last = pallas_layernorm(x.reshape(B * N, E), params["post_ln_g"],
                            params["post_ln_b"], eps=eps).reshape(B, N, E)
    pooled = siglip_pooling_head(last, params["head"], num_heads=num_heads, eps=eps)
    return last, pooled


# -----------------------------------------------------------------------------
# Pure-JAX reference (same math, same bf16 matmul operands / f32 accumulate)
# -----------------------------------------------------------------------------

def _ref_linear(x, w, b, activation=None):
    y = jnp.dot(x.astype(jnp.bfloat16), w.astype(jnp.bfloat16),
                preferred_element_type=jnp.float32) + b[None, :]
    if activation == "gelu_tanh":
        y = _gelu_tanh(y)
    return y


def _ref_layernorm(x, g, b, eps):
    x = x.astype(jnp.float32)
    mu = jnp.mean(x, axis=-1, keepdims=True)
    xc = x - mu
    var = jnp.mean(xc * xc, axis=-1, keepdims=True)
    return xc * jax.lax.rsqrt(var + eps) * g[None, :] + b[None, :]


def _ref_mha(q, k, v, scale):
    q = q.astype(jnp.bfloat16)
    k = k.astype(jnp.bfloat16)
    v = v.astype(jnp.bfloat16)
    s = jnp.einsum("bqd,bkd->bqk", q, k, preferred_element_type=jnp.float32) * scale
    p = _softmax_last(s)
    return jnp.einsum("bqk,bkd->bqd", p.astype(jnp.bfloat16), v,
                      preferred_element_type=jnp.float32)


def _ref_embeddings(pixel_values, conv_w, conv_b, pos, patch_size):
    B, C, H, W = pixel_values.shape
    E = conv_w.shape[0]
    P = patch_size
    GH, GW = H // P, W // P
    N = GH * GW
    K = C * P * P
    patches = pixel_values.reshape(B, C, GH, P, GW, P)
    patches = patches.transpose(0, 2, 4, 1, 3, 5).reshape(B, N, K)
    w = conv_w.reshape(E, K).T
    y = jnp.einsum("bnk,ke->bne", patches.astype(jnp.bfloat16), w.astype(jnp.bfloat16),
                   preferred_element_type=jnp.float32)
    return y + conv_b[None, None, :] + pos[None, :, :]


def reference_forward(pixel_values, params, *, patch_size, num_heads, eps):
    x = _ref_embeddings(pixel_values, params["patch_w"], params["patch_b"],
                        params["pos_emb"], patch_size)
    B, N, E = x.shape
    Dh = E // num_heads
    scale = Dh ** -0.5
    x2 = x.reshape(B * N, E)
    for p in params["layers"]:
        h = _ref_layernorm(x2, p["ln1_g"], p["ln1_b"], eps)
        q = _ref_linear(h, p["q_w"], p["q_b"])
        k = _ref_linear(h, p["k_w"], p["k_b"])
        v = _ref_linear(h, p["v_w"], p["v_b"])
        o = _ref_mha(_split_heads(q, B, N, num_heads, Dh),
                     _split_heads(k, B, N, num_heads, Dh),
                     _split_heads(v, B, N, num_heads, Dh), scale)
        x2 = x2 + _ref_linear(_merge_heads(o, B, N, num_heads, Dh), p["o_w"], p["o_b"])
        h = _ref_layernorm(x2, p["ln2_g"], p["ln2_b"], eps)
        h = _ref_linear(h, p["fc1_w"], p["fc1_b"], activation="gelu_tanh")
        x2 = x2 + _ref_linear(h, p["fc2_w"], p["fc2_b"])
    last = _ref_layernorm(x2, params["post_ln_g"], params["post_ln_b"], eps).reshape(B, N, E)

    hp = params["head"]
    probe = jnp.broadcast_to(hp["probe"].reshape(1, E), (B, E))
    q = _ref_linear(probe, hp["in_q_w"], hp["in_q_b"])
    k = _ref_linear(last.reshape(B * N, E), hp["in_k_w"], hp["in_k_b"])
    v = _ref_linear(last.reshape(B * N, E), hp["in_v_w"], hp["in_v_b"])
    qh = q.reshape(B, 1, num_heads, Dh).transpose(0, 2, 1, 3).reshape(B * num_heads, 1, Dh)
    o = _ref_mha(qh, _split_heads(k, B, N, num_heads, Dh),
                 _split_heads(v, B, N, num_heads, Dh), scale)
    attn = _ref_linear(o.reshape(B, num_heads * Dh), hp["out_w"], hp["out_b"])
    h = _ref_layernorm(attn, hp["ln_g"], hp["ln_b"], eps)
    h = _ref_linear(h, hp["fc1_w"], hp["fc1_b"], activation="gelu_tanh")
    pooled = attn + _ref_linear(h, hp["fc2_w"], hp["fc2_b"])
    return last, pooled


# -----------------------------------------------------------------------------
# deterministic parameter construction
# -----------------------------------------------------------------------------

def make_params(key, *, C, P, N, E, d_ff, num_layers):
    keys = iter(jax.random.split(key, 16 * num_layers + 64))

    def nrm(shape, scale):
        return jax.random.normal(next(keys), shape, dtype=jnp.float32) * scale

    def ln():
        return 1.0 + nrm((E,), 0.1), nrm((E,), 0.1)

    params = {
        "patch_w": nrm((E, C, P, P), 0.02),
        "patch_b": nrm((E,), 0.02),
        "pos_emb": nrm((N, E), 0.02),
        "layers": [],
    }
    for _ in range(num_layers):
        g1, b1 = ln()
        g2, b2 = ln()
        params["layers"].append({
            "ln1_g": g1, "ln1_b": b1,
            "q_w": nrm((E, E), 0.05), "q_b": nrm((E,), 0.01),
            "k_w": nrm((E, E), 0.05), "k_b": nrm((E,), 0.01),
            "v_w": nrm((E, E), 0.05), "v_b": nrm((E,), 0.01),
            "o_w": nrm((E, E), 0.05), "o_b": nrm((E,), 0.01),
            "ln2_g": g2, "ln2_b": b2,
            "fc1_w": nrm((E, d_ff), 0.05), "fc1_b": nrm((d_ff,), 0.01),
            "fc2_w": nrm((d_ff, E), 0.05), "fc2_b": nrm((E,), 0.01),
        })
    params["post_ln_g"], params["post_ln_b"] = ln()
    hg, hb = ln()
    params["head"] = {
        "probe": nrm((1, 1, E), 0.5),
        "in_q_w": nrm((E, E), 0.05), "in_q_b": nrm((E,), 0.01),
        "in_k_w": nrm((E, E), 0.05), "in_k_b": nrm((E,), 0.01),
        "in_v_w": nrm((E, E), 0.05), "in_v_b": nrm((E,), 0.01),
        "out_w": nrm((E, E), 0.05), "out_b": nrm((E,), 0.01),
        "ln_g": hg, "ln_b": hb,
        "fc1_w": nrm((E, d_ff), 0.05), "fc1_b": nrm((d_ff,), 0.01),
        "fc2_w": nrm((d_ff, E), 0.05), "fc2_b": nrm((E,), 0.01),
    }
    return params


if __name__ == "__main__":
    # Small config consistent with the module:
    #   num_channels=4, image_size=16, patch_size=4 -> num_patches=16
    #   hidden_size=32, heads=4 (head_dim=8), intermediate=64, 2 layers
    B, C, IMG, P = 2, 4, 16, 4
    E, HEADS, D_FF, LAYERS = 32, 4, 64, 2
    EPS = 1e-6
    N = (IMG // P) ** 2

    key = jax.random.PRNGKey(0)
    k_x, k_p = jax.random.split(key, 2)
    pixel_values = jax.random.normal(k_x, (B, C, IMG, IMG), dtype=jnp.float32)
    params = make_params(k_p, C=C, P=P, N=N, E=E, d_ff=D_FF, num_layers=LAYERS)

    # --- embeddings kernel check (the previously-reviewed hot path) ---
    emb = siglip_vision_embeddings(pixel_values, params["patch_w"], params["patch_b"],
                                   params["pos_emb"], patch_size=P)
    emb = jax.block_until_ready(emb)
    emb_ref = _ref_embeddings(pixel_values, params["patch_w"], params["patch_b"],
                              params["pos_emb"], P)
    assert emb.shape == (B, N, E)
    assert jnp.allclose(emb, emb_ref, atol=1e-3, rtol=1e-3)

    # --- full transformer forward (embeddings -> encoder -> post-LN -> pooling head) ---
    fwd = jax.jit(functools.partial(siglip_vision_transformer,
                                    patch_size=P, num_heads=HEADS, eps=EPS))
    last, pooled = fwd(pixel_values, params)
    last, pooled = jax.block_until_ready((last, pooled))

    last_ref, pooled_ref = reference_forward(pixel_values, params,
                                             patch_size=P, num_heads=HEADS, eps=EPS)
    assert last.shape == (B, N, E) and pooled.shape == (B, E)
    assert jnp.allclose(last, last_ref, atol=2e-2, rtol=2e-2)
    assert jnp.allclose(pooled, pooled_ref, atol=2e-2, rtol=2e-2)
    print("KERNEL_OK")
</pallas_src>

<mosaic_0001>
module attributes {stable_mosaic.version = 11 : i64} {
  func.func @_embed_kernel(%arg0: i32, %arg1: i32, %arg2: memref<1x16x256xbf16, #tpu.memory_space<vmem>>, %arg3: memref<256x32xbf16, #tpu.memory_space<vmem>>, %arg4: memref<16x32xf32, #tpu.memory_space<vmem>>, %arg5: memref<1x16x32xf32, #tpu.memory_space<vmem>>) attributes {dimension_semantics = [#tpu.dimension_semantics<parallel>, #tpu.dimension_semantics<parallel>], iteration_bounds = array<i64: 2, 1>, scalar_prefetch = 0 : i64, scratch_operands = 0 : i64, tpu.core_type = #tpu.core_type<tc>, window_params = [{transform_indices = @transform_0, window_bounds = array<i64: 1, 16, 256>}, {pipeline_mode = #tpu.pipeline_mode<synchronous>, transform_indices = @transform_1, window_bounds = array<i64: 256, 32>}, {transform_indices = @transform_2, window_bounds = array<i64: 16, 32>}, {transform_indices = @transform_3, window_bounds = array<i64: 1, 16, 32>}]} {
    %c0 = arith.constant 0 : index
    %c0_0 = arith.constant 0 : index
    %c0_1 = arith.constant 0 : index
    %0 = vector.load %arg2[%c0, %c0_0, %c0_1] : memref<1x16x256xbf16, #tpu.memory_space<vmem>>, vector<1x16x256xbf16>
    %1 = vector.shape_cast %0 : vector<1x16x256xbf16> to vector<16x256xbf16>
    %c0_2 = arith.constant 0 : index
    %c0_3 = arith.constant 0 : index
    %2 = vector.load %arg3[%c0_2, %c0_3] : memref<256x32xbf16, #tpu.memory_space<vmem>>, vector<256x32xbf16>
    %cst = arith.constant dense<0.000000e+00> : vector<16x32xf32>
    %3 = tpu.matmul %1, %2, %cst {dimension_numbers = #tpu.dot_dimension_numbers<[1], [0], [0], [1], [0, 0, 1, 1], [], []>} : vector<16x256xbf16>, vector<256x32xbf16>, vector<16x32xf32> -> vector<16x32xf32>
    %c0_4 = arith.constant 0 : index
    %c0_5 = arith.constant 0 : index
    %4 = vector.load %arg4[%c0_4, %c0_5] : memref<16x32xf32, #tpu.memory_space<vmem>>, vector<16x32xf32>
    %5 = arith.addf %3, %4 : vector<16x32xf32>
    %c0_6 = arith.constant 0 : index
    %c0_7 = arith.constant 0 : index
    %c0_8 = arith.constant 0 : index
    %6 = vector.load %arg5[%c0_6, %c0_7, %c0_8] : memref<1x16x32xf32, #tpu.memory_space<vmem>>, vector<1x16x32xf32>
    %7 = vector.shape_cast %6 : vector<1x16x32xf32> to vector<16x32xf32>
    %8 = vector.shape_cast %5 : vector<16x32xf32> to vector<1x16x32xf32>
    tpu.vector_store %arg5[%c0_6, %c0_7, %c0_8], %8 {strides = array<i32>} : memref<1x16x32xf32, #tpu.memory_space<vmem>>, vector<1x16x32xf32>,
    return
  }
  func.func @transform_0(%arg0: i32, %arg1: i32) -> (i32, i32, i32) {
    %c0_i32 = arith.constant 0 : i32
    %c0_i32_0 = arith.constant 0 : i32
    return %arg0, %arg1, %c0_i32 : i32, i32, i32
  }
  func.func @transform_1(%arg0: i32, %arg1: i32) -> (i32, i32) {
    %c0_i32 = arith.constant 0 : i32
    %c0_i32_0 = arith.constant 0 : i32
    %c0_i32_1 = arith.constant 0 : i32
    return %c0_i32, %c0_i32_0 : i32, i32
  }
  func.func @transform_2(%arg0: i32, %arg1: i32) -> (i32, i32) {
    %c0_i32 = arith.constant 0 : i32
    %c0_i32_0 = arith.constant 0 : i32
    return %arg1, %c0_i32 : i32, i32
  }
  func.func @transform_3(%arg0: i32, %arg1: i32) -> (i32, i32, i32) {
    %c0_i32 = arith.constant 0 : i32
    %c0_i32_0 = arith.constant 0 : i32
    return %arg0, %arg1, %c0_i32 : i32, i32, i32
  }
}

</mosaic_0001>

<llo_original>
// kernel: tpu_custom_call.1
$region0: #{tpu_custom_call.1}
  #allocation0 [shape = 'u32[]', space=smem, size = 0x4, offset = 0x4, fixed_abs, tag = 'smem constant byte address 0x4 - core index']
  #allocation1 [shape = 'u32[144,128]{1,0:T(1,128)}', space=vmem, size = 0x12000, scoped, tag = 'internal scratch']
  %s0 = inlined_call_operand.vmem [shape: bf16[2,16,256], index: 0, kind: input, shape index: {}]
  %s1 = inlined_call_operand.vmem [shape: bf16[256,32], index: 1, kind: input, shape index: {}]
  %s2 = inlined_call_operand.vmem [shape: f32[16,32], index: 2, kind: input, shape index: {}]
  %s3 = inlined_call_operand.hbm [shape: f32[2,16,32], index: 3, kind: output, shape index: {}]
  %s4 = sld [smem:[#allocation0]]
  $region45: #{tpu_custom_call.1} parent=0
    _
  %s6 = ssub.s32 1, %s4
  %s7 = scalar_select 0, %s6, %s4
  $region1: #{tpu_custom_call.1} parent=0
    #allocation2 [shape = 'u8[16384]{0}', space=vmem, size = 0x4000, scoped, tag = 'output window, operand 0']
    #allocation3 [shape = 's32[2]{0}', space=sflag, size = 0x8, scoped, tag = 'scoped memory for tpu_custom_call.1']
    %8 = vsyncpa [#allocation3], 0
    %s9 = scalar_lea.sflag [#allocation3], 1
    %10 = vsyncpa %s9, 0
    loop: start=0, step=1, limit=4
    $region2: #{tpu_custom_call.1} parent=1 // loop_pre_header
      _
    $region3: #{tpu_custom_call.1} parent=1 // loop_header
      %s12 = sphi 0, %s16
      %p13 = scmp.ge.s32.totalorder %s12, 4
      %s19 = sphi 0, %s31
      %s20 = sphi 0, %s27
      %s21 = sphi 0, %s19
      %s22 = sphi 0, %s20
      %s23 = sphi 0, %s21
      %s24 = sphi 0, %s22
      %s36 = sphi 0, %s38
      %s39 = sphi 0, %s36
      %s40 = sphi 0, %s39
      %s56 = sphi 0, %s40
      %s60 = sphi 0, %s60
      %s62 = sphi 0, %s60
      %s63 = sphi 0, %s62
      %s77 = sphi 0, %s63
      %s83 = sphi 0, %s85
      %s86 = sphi 0, %s83
      %s87 = sphi 0, %s86
      %s103 = sphi 0, %s87
      %s111 = sphi 0, %s113
      %s114 = sphi 0, %s111
      %s115 = sphi 0, %s114
      %s131 = sphi 0, %s115
    $region4: #{tpu_custom_call.1} parent=1 // loop_header_branch
      %15 = sbr.rel (%p13) target = $region8
    $region5: #{tpu_custom_call.1} parent=1 // loop_body
      %s17 = ssub.s32 %s12, 1
      %s18 = ssub.s32 %s12, 2
      %s25 = sadd.s32 1, %s20
      %p26 = scmp.ge.s32.totalorder %s25, 1
      %s27 = scalar_select %p26, 0, %s25
      %s28 = sadd.s32 1, %s19
      %s29 = scalar_select %p26, %s28, %s19
      %p30 = scmp.ge.s32.totalorder %s29, 2
      %s31 = scalar_select %p30, 0, %s29
      %s32 = ssub.s32 %s19, %s31
      %s33 = ssub.s32 %s20, %s27
      %s34 = sor.u32 %s32, %s33
      %p35 = scmp.eq.s32.totalorder %s34, 0
      %s37 = sadd.s32 %s36, 1
      %s38 = scalar_select %p35, %s36, %s37
      %p41 = pneg %p35
      %p42 = scmp.eq.s32.totalorder %s12, 1
      %p43 = por %p41, %p42
      %p44 = scmp.ne.s32.totalorder %s36, %s39
      %p45 = scmp.eq.s32.totalorder %s12, 0
      %p46 = por %p44, %p45
      %p47 = scmp.ne.s32.totalorder %s36, %s39
      %p48 = scmp.eq.s32.totalorder %s17, 1
      %p49 = por %p47, %p48
      %p50 = scmp.ne.s32.totalorder %s39, %s40
      %p51 = scmp.eq.s32.totalorder %s17, 0
      %p52 = por %p50, %p51
      %p53 = scmp.ne.s32.totalorder %s39, %s40
      %p54 = scmp.eq.s32.totalorder %s18, 1
      %p55 = por %p53, %p54
      %p57 = scmp.ne.s32.totalorder %s40, %s56
      %p58 = scmp.eq.s32.totalorder %s18, 0
      %p59 = por %p57, %p58
      %s61 = sadd.s32 %s60, 1
      %p64 = scmp.eq.s32.totalorder %s12, 1
      %p65 = scmp.ne.s32.totalorder %s60, %s62
      %p66 = scmp.eq.s32.totalorder %s12, 0
      %p67 = por %p65, %p66
      %p68 = scmp.ne.s32.totalorder %s60, %s62
      %p69 = scmp.eq.s32.totalorder %s17, 1
      %p70 = por %p68, %p69
      %p71 = scmp.ne.s32.totalorder %s62, %s63
      %p72 = scmp.eq.s32.totalorder %s17, 0
      %p73 = por %p71, %p72
      %p74 = scmp.ne.s32.totalorder %s62, %s63
      %p75 = scmp.eq.s32.totalorder %s18, 1
      %p76 = por %p74, %p75
      %p78 = scmp.ne.s32.totalorder %s63, %s77
      %p79 = scmp.eq.s32.totalorder %s18, 0
      %p80 = por %p78, %p79
      %s81 = ssub.s32 %s20, %s27
      %p82 = scmp.eq.s32.totalorder %s81, 0
      %s84 = sadd.s32 %s83, 1
      %s85 = scalar_select %p82, %s83, %s84
      %p88 = pneg %p82
      %p89 = scmp.eq.s32.totalorder %s12, 1
      %p90 = por %p88, %p89
      %p91 = scmp.ne.s32.totalorder %s83, %s86
      %p92 = scmp.eq.s32.totalorder %s12, 0
      %p93 = por %p91, %p92
      %p94 = scmp.ne.s32.totalorder %s83, %s86
      %p95 = scmp.eq.s32.totalorder %s17, 1
      %p96 = por %p94, %p95
      %p97 = scmp.ne.s32.totalorder %s86, %s87
      %p98 = scmp.eq.s32.totalorder %s17, 0
      %p99 = por %p97, %p98
      %p100 = scmp.ne.s32.totalorder %s86, %s87
      %p101 = scmp.eq.s32.totalorder %s18, 1
      %p102 = por %p100, %p101
      %p104 = scmp.ne.s32.totalorder %s87, %s103
      %p105 = scmp.eq.s32.totalorder %s18, 0
      %p106 = por %p104, %p105
      %s107 = ssub.s32 %s19, %s31
      %s108 = ssub.s32 %s20, %s27
      %s109 = sor.u32 %s107, %s108
      %p110 = scmp.eq.s32.totalorder %s109, 0
      %s112 = sadd.s32 %s111, 1
      %s113 = scalar_select %p110, %s111, %s112
      %p116 = pneg %p110
      %p117 = scmp.eq.s32.totalorder %s12, 1
      %p118 = por %p116, %p117
      %p119 = scmp.ne.s32.totalorder %s111, %s114
      %p120 = scmp.eq.s32.totalorder %s12, 0
      %p121 = por %p119, %p120
      %p122 = scmp.ne.s32.totalorder %s111, %s114
      %p123 = scmp.eq.s32.totalorder %s17, 1
      %p124 = por %p122, %p123
      %p125 = scmp.ne.s32.totalorder %s114, %s115
      %p126 = scmp.eq.s32.totalorder %s17, 0
      %p127 = por %p125, %p126
      %p128 = scmp.ne.s32.totalorder %s114, %s115
      %p129 = scmp.eq.s32.totalorder %s18, 1
      %p130 = por %p128, %p129
      %p132 = scmp.ne.s32.totalorder %s115, %s131
      %p133 = scmp.eq.s32.totalorder %s18, 0
      %p134 = por %p132, %p133
      %p135 = scmp.le.s32.totalorder 1, %s12
      %p136 = scmp.lt.s32.totalorder %s12, 3
      %p137 = pnand %p135, %p136
      %p138 = pneg %p137
      // Predicated region
      $region9: #{tpu_custom_call.1} parent=5 // pred_check
        _
      $region10: #{tpu_custom_call.1} parent=5 // pred_check_branch
        %140 = sbr.rel (%p137) target = $region12
      $region11: #{tpu_custom_call.1} parent=5 // pred_region
        %s141 = ssub.s32 %s12, 1
        // Predicated region
        $region13: #{tpu_custom_call.1} parent=11 // pred_check
          %p142 = pneg %p73
        $region14: #{tpu_custom_call.1} parent=11 // pred_check_branch
          %144 = sbr.rel (%p142) target = $region16
        $region15: #{tpu_custom_call.1} parent=11 // pred_region
          _
        $region16: #{tpu_custom_call.1} parent=11 // pred_fallthru
          _
        // Predicated region
        $region17: #{tpu_custom_call.1} parent=11 // pred_check
          %p145 = pneg %p99
        $region18: #{tpu_custom_call.1} parent=11 // pred_check_branch
          %147 = sbr.rel (%p145) target = $region20
        $region19: #{tpu_custom_call.1} parent=11 // pred_region
          %s148 = smul.u32 2, %s22
          %p149 = scmp.lt.s32.totalorder %s148, 1
          %s150 = scalar_select %p149, %s148, 1
          %s151 = smul.addr %s150, 8
          %s152 = scalar_lea.vmem %s2, %s151
          %s153 = smul.u32 2, %s22
        $region20: #{tpu_custom_call.1} parent=11 // pred_fallthru
          _
      $region12: #{tpu_custom_call.1} parent=5 // pred_fallthru
        _
      %p154 = scmp.lt.s32.totalorder %s12, 2
      // Predicated region
      $region21: #{tpu_custom_call.1} parent=5 // pred_check
        %p155 = pneg %p154
      $region22: #{tpu_custom_call.1} parent=5 // pred_check_branch
        %157 = sbr.rel (%p155) target = $region24
      $region23: #{tpu_custom_call.1} parent=5 // pred_region
        // Predicated region
        $region25: #{tpu_custom_call.1} parent=23 // pred_check
          %p158 = pneg %p46
        $region26: #{tpu_custom_call.1} parent=23 // pred_check_branch
          %160 = sbr.rel (%p158) target = $region28
        $region27: #{tpu_custom_call.1} parent=23 // pred_region
          %s161 = smul.u32 2, %s20
          %p162 = scmp.lt.s32.totalorder %s19, 1
          %s163 = scalar_select %p162, %s19, 1
          %p164 = scmp.lt.s32.totalorder %s161, 1
          %s165 = scalar_select %p164, %s161, 1
          %s166 = smul.addr %s165, 2
          %s167 = smul.addr %s163, 4
          %s168 = sadd.s32 %s166, %s167
          %s169 = smul.addr %s168, 4
          %s170 = scalar_lea.vmem %s0, %s169
          %s171 = smul.u32 2, %s20
        $region28: #{tpu_custom_call.1} parent=23 // pred_fallthru
          _
      $region24: #{tpu_custom_call.1} parent=5 // pred_fallthru
        _
      %p172 = scmp.le.s32.totalorder 1, %s12
      %p173 = scmp.lt.s32.totalorder %s12, 3
      %p174 = pnand %p172, %p173
      %p175 = pneg %p174
      // Predicated region
      $region29: #{tpu_custom_call.1} parent=5 // pred_check
        _
      $region30: #{tpu_custom_call.1} parent=5 // pred_check_branch
        %177 = sbr.rel (%p174) target = $region32
      $region31: #{tpu_custom_call.1} parent=5 // pred_region
        %s178 = ssub.s32 %s12, 1
        %s179 = smul.u32 2, %s22
        %p180 = scmp.lt.s32.totalorder %s21, 1
        %s181 = scalar_select %p180, %s21, 1
        %p182 = scmp.lt.s32.totalorder %s179, 1
        %s183 = scalar_select %p182, %s179, 1
        %s184 = smul.addr %s183, 2
        %s185 = smul.addr %s181, 4
        %s186 = sadd.s32 %s184, %s185
        %s187 = smul.addr %s186, 4
        %s188 = scalar_lea.vmem %s0, %s187
        %p189 = pneg %p52
        %p190 = pneg %p49
        %p191 = pneg %p73
        %p192 = pneg %p70
        %s193 = smul.u32 2, %s22
        %p194 = scmp.lt.s32.totalorder %s193, 1
        %s195 = scalar_select %p194, %s193, 1
        %s196 = smul.addr %s195, 8
        %s197 = scalar_lea.vmem %s2, %s196
        %p198 = pneg %p99
        %p199 = pneg %p96
        %p200 = pneg %p127
        %p201 = pneg %p124
        %s202 = sand.u32 %s114, 1
        %s203 = scalar_lea.sflag [#allocation3], %s202
        %s204 = sand.u32 %s114, 1
        %s205 = smul.addr %s204, 16
        %s206 = scalar_lea.vmem [#allocation2], %s205
        %s207 = smul.u32 2, %s22
        %p208 = scmp.lt.s32.totalorder %s21, 1
        %s209 = scalar_select %p208, %s21, 1
        %p210 = scmp.lt.s32.totalorder %s207, 1
        %s211 = scalar_select %p210, %s207, 1
        %s212 = smul.addr %s211, 2
        %s213 = smul.addr %s209, 4
        %s214 = sadd.s32 %s212, %s213
        %s215 = smul.addr %s214, 4
        %s216 = scalar_lea.vmem %s0, %s215
        %s217 = smul.u32 2, %s22
        %s218 = smul.u32 2, %s22
        %p219 = scmp.lt.s32.totalorder %s218, 1
        %s220 = scalar_select %p219, %s218, 1
        %s221 = smul.addr %s220, 8
        %s222 = scalar_lea.vmem %s2, %s221
        %s223 = smul.u32 2, %s22
        %s224 = smul.u32 2, %s22
        %v226 = vld [vmem:[%s216] sm:$0xff]
        %v227 = vld [vmem:[%s216 + $0x8] sm:$0xff]
        %v228 = vld [vmem:[%s1] sm:$0xf]
        %v229 = vld [vmem:[%s1 + $0x4] sm:$0xf]
        %v230 = vld [vmem:[%s1 + $0x8] sm:$0xf]
        %v231 = vld [vmem:[%s1 + $0xc] sm:$0xf]
        %v232 = vld [vmem:[%s1 + $0x10] sm:$0xf]
        %v233 = vld [vmem:[%s1 + $0x14] sm:$0xf]
        %v234 = vld [vmem:[%s1 + $0x18] sm:$0xf]
        %v235 = vld [vmem:[%s1 + $0x1c] sm:$0xf]
        %v236 = vld [vmem:[%s1 + $0x20] sm:$0xf]
        %v237 = vld [vmem:[%s1 + $0x24] sm:$0xf]
        %v238 = vld [vmem:[%s1 + $0x28] sm:$0xf]
        %v239 = vld [vmem:[%s1 + $0x2c] sm:$0xf]
        %v240 = vld [vmem:[%s1 + $0x30] sm:$0xf]
        %v241 = vld [vmem:[%s1 + $0x34] sm:$0xf]
        %v242 = vld [vmem:[%s1 + $0x38] sm:$0xf]
        %v243 = vld [vmem:[%s1 + $0x3c] sm:$0xf]
        %v244 = vld [vmem:[%s1 + $0x40] sm:$0xf]
        %v245 = vld [vmem:[%s1 + $0x44] sm:$0xf]
        %v246 = vld [vmem:[%s1 + $0x48] sm:$0xf]
        %v247 = vld [vmem:[%s1 + $0x4c] sm:$0xf]
        %v248 = vld [vmem:[%s1 + $0x50] sm:$0xf]
        %v249 = vld [vmem:[%s1 + $0x54] sm:$0xf]
        %v250 = vld [vmem:[%s1 + $0x58] sm:$0xf]
        %v251 = vld [vmem:[%s1 + $0x5c] sm:$0xf]
        %v252 = vld [vmem:[%s1 + $0x60] sm:$0xf]
        %v253 = vld [vmem:[%s1 + $0x64] sm:$0xf]
        %v254 = vld [vmem:[%s1 + $0x68] sm:$0xf]
        %v255 = vld [vmem:[%s1 + $0x6c] sm:$0xf]
        %v256 = vld [vmem:[%s1 + $0x70] sm:$0xf]
        %v257 = vld [vmem:[%s1 + $0x74] sm:$0xf]
        %v258 = vld [vmem:[%s1 + $0x78] sm:$0xf]
        %v259 = vld [vmem:[%s1 + $0x7c] sm:$0xf]
        %v260 = vld [vmem:[%s222] sm:$0xff]
        %v261 = vld [vmem:[%s222 + $0x8] sm:$0xff]
        %v264 = vunpack.c.l.b16 %v226
        %v265 = vunpack.c.h.b16 %v226
        %v266 = vunpack.c.l.b16 %v227
        %v267 = vunpack.c.h.b16 %v227
        %v268 = vpack.c.b16 %v266, %v264
        %v269 = vpack.c.b16 %v267, %v265
        %v304 = vunpack.c.l.b16 %v228
        %v305 = vunpack.c.l.b16 %v229
        %v306 = vunpack.c.l.b16 %v230
        %v307 = vunpack.c.l.b16 %v231
        %v308 = vunpack.c.l.b16 %v232
        %v309 = vunpack.c.l.b16 %v233
        %v310 = vunpack.c.l.b16 %v234
        %v311 = vunpack.c.l.b16 %v235
        %v312 = vunpack.c.l.b16 %v236
        %v313 = vunpack.c.l.b16 %v237
        %v314 = vunpack.c.l.b16 %v238
        %v315 = vunpack.c.l.b16 %v239
        %v316 = vunpack.c.l.b16 %v240
        %v317 = vunpack.c.l.b16 %v241
        %v318 = vunpack.c.l.b16 %v242
        %v319 = vunpack.c.l.b16 %v243
        %v320 = vunpack.c.l.b16 %v244
        %v321 = vunpack.c.l.b16 %v245
        %v322 = vunpack.c.l.b16 %v246
        %v323 = vunpack.c.l.b16 %v247
        %v324 = vunpack.c.l.b16 %v248
        %v325 = vunpack.c.l.b16 %v249
        %v326 = vunpack.c.l.b16 %v250
        %v327 = vunpack.c.l.b16 %v251
        %v328 = vunpack.c.l.b16 %v252
        %v329 = vunpack.c.l.b16 %v253
        %v330 = vunpack.c.l.b16 %v254
        %v331 = vunpack.c.l.b16 %v255
        %v332 = vunpack.c.l.b16 %v256
        %v333 = vunpack.c.l.b16 %v257
        %v334 = vunpack.c.l.b16 %v258
        %v335 = vunpack.c.l.b16 %v259
        %v336 = vpack.c.b16 %v305, %v304
        %v337 = vpack.c.b16 %v307, %v306
        %v338 = vpack.c.b16 %v309, %v308
        %v339 = vpack.c.b16 %v311, %v310
        %v340 = vpack.c.b16 %v313, %v312
        %v341 = vpack.c.b16 %v315, %v314
        %v342 = vpack.c.b16 %v317, %v316
        %v343 = vpack.c.b16 %v319, %v318
        %v344 = vpack.c.b16 %v321, %v320
        %v345 = vpack.c.b16 %v323, %v322
        %v346 = vpack.c.b16 %v325, %v324
        %v347 = vpack.c.b16 %v327, %v326
        %v348 = vpack.c.b16 %v329, %v328
        %v349 = vpack.c.b16 %v331, %v330
        %v350 = vpack.c.b16 %v333, %v332
        %v351 = vpack.c.b16 %v335, %v334
        %368 = vmatprep.subr.bf16.mxu0 0
        %369 = vmatpush1.bf16.msra.mxu0 %v336
        %370 = vmatprep.subr.bf16.mxu0 0
        %371 = vmatpush1.bf16.msra.mxu0 %v337
        %372 = vmatprep.subr.bf16.mxu0 0
        %373 = vmatpush1.bf16.msra.mxu0 %v338
        %374 = vmatprep.subr.bf16.mxu0 0
        %375 = vmatpush1.bf16.msra.mxu0 %v339
        %376 = vmatprep.subr.bf16.mxu0 0
        %377 = vmatpush1.bf16.msra.mxu0 %v340
        %378 = vmatprep.subr.bf16.mxu0 0
        %379 = vmatpush1.bf16.msra.mxu0 %v341
        %380 = vmatprep.subr.bf16.mxu0 0
        %381 = vmatpush1.bf16.msra.mxu0 %v342
        %382 = vmatprep.subr.bf16.mxu0 0
        %383 = vmatpush1.bf16.msra.mxu0 %v343
        %384 = vmatprep.subr.bf16.mxu0 0
        %385 = vmatpush1.bf16.msra.mxu0 %v344
        %386 = vmatprep.subr.bf16.mxu0 0
        %387 = vmatpush1.bf16.msra.mxu0 %v345
        %388 = vmatprep.subr.bf16.mxu0 0
        %389 = vmatpush1.bf16.msra.mxu0 %v346
        %390 = vmatprep.subr.bf16.mxu0 0
        %391 = vmatpush1.bf16.msra.mxu0 %v347
        %392 = vmatprep.subr.bf16.mxu0 0
        %393 = vmatpush1.bf16.msra.mxu0 %v348
        %394 = vmatprep.subr.bf16.mxu0 0
        %395 = vmatpush1.bf16.msra.mxu0 %v349
        %396 = vmatprep.subr.bf16.mxu0 0
        %397 = vmatpush1.bf16.msra.mxu0 %v350
        %398 = vmatprep.subr.bf16.mxu0 0
        %399 = vmatpush1.bf16.msra.mxu0 %v351
        %400 = vmatprep.mubr.bf16.mxu0 %v269
        %401 = vmatmul.mubr.bf16.gmra.mrb[0].mxu0 %v268
        %v402 = vpop.f32.mrb[0].mxu0
        %v403 = vadd.f32 %v260, %v402
        %v404 = vpop.f32.mrb[0].mxu0
        %v405 = vpop.f32.mrb[0].mxu0
        %v406 = vadd.f32 %v261, %v405
        %v407 = vpop.f32.mrb[0].mxu0
        %408 = vdwg.mxu0
        %vm409 = vcmask 261120
        %410 = vst.msk [vmem:[%s206] sm:$0xff] %vm409, %v403
        %411 = vst.msk [vmem:[%s206 + $0x8] sm:$0xff] %vm409, %v406
        %s412 = sand.u32 %s114, 1
        %s413 = scalar_lea.sflag [#allocation3], %s412
        %s414 = sand.u32 %s114, 1
        %s415 = smul.addr %s414, 16
        %s416 = scalar_lea.vmem [#allocation2], %s415
        // Predicated region
        $region33: #{tpu_custom_call.1} parent=31 // pred_check
          %p417 = pneg %p124
        $region34: #{tpu_custom_call.1} parent=31 // pred_check_branch
          %419 = sbr.rel (%p417) target = $region36
        $region35: #{tpu_custom_call.1} parent=31 // pred_region
          %s420 = smul.u32 2, %s22
          %s422 = ssub.s32 256, 256
          %423 = vsyncadd %s413, %s422
          %s424 = smul.addr %s21, 2
          %s425 = sadd.s32 %s420, %s424
          %s426 = smul.addr %s425, 128
          %s427 = scalar_lea.hbm %s3, %s426
          %s428 = sshll.u32 %s416, 4
          %s429 = int_to_ptr.vmem [resolvable:$true] %s428
          %434 = dma.vmem_to_hbm [thread:$0]  %s429, 256, %s427, %s413, 128, 128, 8
        $region36: #{tpu_custom_call.1} parent=31 // pred_fallthru
          _
      $region32: #{tpu_custom_call.1} parent=5 // pred_fallthru
        _
      %p435 = scmp.le.s32.totalorder 2, %s12
      // Predicated region
      $region37: #{tpu_custom_call.1} parent=5 // pred_check
        %p436 = pneg %p435
      $region38: #{tpu_custom_call.1} parent=5 // pred_check_branch
        %438 = sbr.rel (%p436) target = $region40
      $region39: #{tpu_custom_call.1} parent=5 // pred_region
        %s439 = ssub.s32 %s12, 2
        // Predicated region
        $region41: #{tpu_custom_call.1} parent=39 // pred_check
          %p440 = pneg %p130
        $region42: #{tpu_custom_call.1} parent=39 // pred_check_branch
          %442 = sbr.rel (%p440) target = $region44
        $region43: #{tpu_custom_call.1} parent=39 // pred_region
          %s443 = sand.u32 %s115, 1
          %s444 = scalar_lea.sflag [#allocation3], %s443
          %s445 = sand.u32 %s115, 1
          %s446 = smul.addr %s445, 16
          %s447 = scalar_lea.vmem [#allocation2], %s446
          %448 = dma.done %s444, 256
        $region44: #{tpu_custom_call.1} parent=39 // pred_fallthru
          _
      $region40: #{tpu_custom_call.1} parent=5 // pred_fallthru
        _
    $region6: #{tpu_custom_call.1} parent=1 // loop_footer
      %s16 = sadd.s32 1, %s12
    $region7: #{tpu_custom_call.1} parent=1 // loop_footer_branch
      %11 = sbr.rel target = $region3
    $region8: #{tpu_custom_call.1} parent=1 // loop_exit
      _
    %449 = vsyncpa [#allocation3], 1
    %s450 = scalar_lea.sflag [#allocation3], 1
    %451 = vsyncpa %s450, 1

</llo_original>
